<compile_context>
chip_gen: v7x
topology: tpu7x:2x2x1
jax: 0.10.0
libtpu: 0.0.40
codegen_flags: <defaults>
</compile_context>

<pallas_src>
import math
from functools import partial

import jax
import jax.numpy as jnp
from jax.experimental import pallas as pl
from jax.experimental.pallas import tpu as pltpu


def _round_up(x, m):
    return (x + m - 1) // m * m


def _mapper_kernel(x_ref, w_ref, b_ref, o_ref, acc_ref, *,
                   scale, pos_scale, neg_scale):
    """One (n-tile, k-tile) grid step of  out = lrelu(scale*(x@W.T) + b*lr_mul)*sqrt(2).

    x_ref  : (B, tk)   f32  activation slice along the reduction dim
    w_ref  : (tk, tn)  f32  pre-transposed weight tile (in-dim, out-dim)
    b_ref  : (1, tn)   f32  bias already multiplied by lr_mul
    o_ref  : (B, tn)
    acc_ref: (B, tn)   f32  accumulator, resident across the k axis
    """
    k = pl.program_id(1)

    @pl.when(k == 0)
    def _():
        acc_ref[...] = jnp.zeros_like(acc_ref)

    acc_ref[...] += jnp.dot(x_ref[...], w_ref[...],
                            preferred_element_type=jnp.float32)

    @pl.when(k == pl.num_programs(1) - 1)
    def _():
        # scale is a scalar: x @ (W*scale).T == scale * (x @ W.T), so apply it once
        # on the (B, tn) accumulator instead of scaling the DxD weight.
        y = acc_ref[...] * scale + b_ref[...]
        # leaky_relu(y, 0.2) * sqrt(2), folded into a single select + mul.
        y = y * jnp.where(y >= 0.0, pos_scale, neg_scale)
        o_ref[...] = y.astype(o_ref.dtype)


def mapper_layer(x, weight, bias, *, lr_mul=0.01, negative_slope=0.2,
                 act_scale=2 ** 0.5, tile=256):
    """x: (B, D) f32, weight: (D, D) f32 (nn.Linear [out,in] layout), bias: (D,) f32."""
    B, D = x.shape
    assert weight.shape == (D, D)
    assert bias.shape == (D,)
    scale = 1.0 / math.sqrt(D) * lr_mul

    # --- wrapper-side layout plumbing (one-time / amortized) -----------------
    # Pre-transpose the weight so the kernel RHS is (K, N); fold lr_mul into the
    # bias.  Pad B to a multiple of 8 sublanes and D to a multiple of the tile
    # size (>= 128 lanes) so every block is (8,128)-aligned and output stores
    # are unmasked, lane-dense vst's.  Zero padding is exact: padded input
    # columns hit zero weight rows, padded output columns get lrelu(0)=0 and are
    # sliced off.
    tile = max(128, min(tile, _round_up(D, 128)))
    d_pad = _round_up(D, tile)
    b_pad = _round_up(B, 8)

    w_t = jnp.zeros((d_pad, d_pad), dtype=weight.dtype).at[:D, :D].set(weight.T)
    x_p = jnp.zeros((b_pad, d_pad), dtype=x.dtype).at[:B, :D].set(x)
    b_p = jnp.zeros((1, d_pad), dtype=bias.dtype).at[0, :D].set(bias * lr_mul)

    grid = (d_pad // tile, d_pad // tile)  # (n-tiles, k-tiles); reduction last

    kernel = partial(_mapper_kernel, scale=scale, pos_scale=act_scale,
                     neg_scale=negative_slope * act_scale)

    out = pl.pallas_call(
        kernel,
        out_shape=jax.ShapeDtypeStruct((b_pad, d_pad), x.dtype),
        grid_spec=pltpu.PrefetchScalarGridSpec(
            num_scalar_prefetch=0,
            grid=grid,
            in_specs=[
                pl.BlockSpec((b_pad, tile), lambda i, k: (0, k)),  # x slice
                pl.BlockSpec((tile, tile), lambda i, k: (k, i)),   # W.T tile
                pl.BlockSpec((1, tile), lambda i, k: (0, i)),      # bias*lr_mul
            ],
            out_specs=pl.BlockSpec((b_pad, tile), lambda i, k: (0, i)),
            scratch_shapes=[pltpu.VMEM((b_pad, tile), jnp.float32)],
        ),
        compiler_params=pltpu.CompilerParams(
            dimension_semantics=("parallel", "arbitrary")),
    )(x_p, w_t, b_p)

    return out[:B, :D]


def mapper_layer_ref(x, weight, bias, *, lr_mul=0.01, negative_slope=0.2,
                     act_scale=2 ** 0.5):
    D = x.shape[-1]
    scale = 1.0 / math.sqrt(D) * lr_mul
    y = x @ (weight * scale).T + bias * lr_mul
    return jnp.where(y >= 0.0, y, y * negative_slope) * act_scale


if __name__ == "__main__":
    key = jax.random.PRNGKey(0)
    lr_mul = 0.01

    # (batch, dim, bias_init): small demo shape + a multi-tile / padded config.
    configs = [(8, 32, 0.0), (5, 320, 0.5)]

    for batch, dim, bias_init in configs:
        key, k_x, k_w = jax.random.split(key, 3)
        x = jax.random.normal(k_x, (batch, dim), dtype=jnp.float32)
        # nn.Parameter(torch.randn(dim, dim).div_(lr_mul))
        weight = jax.random.normal(k_w, (dim, dim), dtype=jnp.float32) / lr_mul
        # nn.Parameter(torch.zeros(dim).fill_(bias_init))
        bias = jnp.full((dim,), bias_init, dtype=jnp.float32)

        out = jax.block_until_ready(mapper_layer(x, weight, bias, lr_mul=lr_mul))
        ref = mapper_layer_ref(x, weight, bias, lr_mul=lr_mul)

        assert out.shape == (batch, dim)
        assert jnp.allclose(out, ref, atol=1e-4, rtol=1e-4), \
            f"mismatch vs reference at batch={batch}, dim={dim}"

    print("KERNEL_OK")
</pallas_src>

<mosaic_0001>
module attributes {stable_mosaic.version = 11 : i64} {
  func.func @_mapper_kernel(%arg0: i32, %arg1: i32, %arg2: memref<8x128xf32, #tpu.memory_space<vmem>>, %arg3: memref<128x128xf32, #tpu.memory_space<vmem>>, %arg4: memref<1x128xf32, #tpu.memory_space<vmem>>, %arg5: memref<8x128xf32, #tpu.memory_space<vmem>>, %arg6: memref<8x128xf32, #tpu.memory_space<vmem>>) attributes {dimension_semantics = [#tpu.dimension_semantics<parallel>, #tpu.dimension_semantics<arbitrary>], iteration_bounds = array<i64: 1, 1>, scalar_prefetch = 0 : i64, scratch_operands = 1 : i64, tpu.core_type = #tpu.core_type<tc>, window_params = [{transform_indices = @transform_0, window_bounds = array<i64: 8, 128>}, {transform_indices = @transform_1, window_bounds = array<i64: 128, 128>}, {transform_indices = @transform_2, window_bounds = array<i64: 1, 128>}, {transform_indices = @transform_3, window_bounds = array<i64: 8, 128>}]} {
    %c0_i32 = arith.constant 0 : i32
    %0 = arith.cmpi eq, %arg1, %c0_i32 : i32
    %1 = arith.extui %0 : i1 to i32
    %c0_i32_0 = arith.constant 0 : i32
    %2 = arith.cmpi ne, %1, %c0_i32_0 : i32
    scf.if %2 {
      %cst_10 = arith.constant 0.000000e+00 : f32
      %12 = vector.broadcast %cst_10 : f32 to vector<8x128xf32>
      %c0_11 = arith.constant 0 : index
      %c0_12 = arith.constant 0 : index
      %13 = vector.load %arg6[%c0_11, %c0_12] : memref<8x128xf32, #tpu.memory_space<vmem>>, vector<8x128xf32>
      tpu.vector_store %arg6[%c0_11, %c0_12], %12 {strides = array<i32>} : memref<8x128xf32, #tpu.memory_space<vmem>>, vector<8x128xf32>,
    } else {
    }
    %c0 = arith.constant 0 : index
    %c0_1 = arith.constant 0 : index
    %3 = vector.load %arg6[%c0, %c0_1] : memref<8x128xf32, #tpu.memory_space<vmem>>, vector<8x128xf32>
    %c0_2 = arith.constant 0 : index
    %c0_3 = arith.constant 0 : index
    %4 = vector.load %arg2[%c0_2, %c0_3] : memref<8x128xf32, #tpu.memory_space<vmem>>, vector<8x128xf32>
    %c0_4 = arith.constant 0 : index
    %c0_5 = arith.constant 0 : index
    %5 = vector.load %arg3[%c0_4, %c0_5] : memref<128x128xf32, #tpu.memory_space<vmem>>, vector<128x128xf32>
    %cst = arith.constant dense<0.000000e+00> : vector<8x128xf32>
    %6 = tpu.matmul %4, %5, %cst {dimension_numbers = #tpu.dot_dimension_numbers<[1], [0], [0], [1], [0, 0, 1, 1], [], []>} : vector<8x128xf32>, vector<128x128xf32>, vector<8x128xf32> -> vector<8x128xf32>
    %7 = arith.addf %3, %6 : vector<8x128xf32>
    %c0_6 = arith.constant 0 : index
    %c0_7 = arith.constant 0 : index
    %8 = vector.load %arg6[%c0_6, %c0_7] : memref<8x128xf32, #tpu.memory_space<vmem>>, vector<8x128xf32>
    tpu.vector_store %arg6[%c0_6, %c0_7], %7 {strides = array<i32>} : memref<8x128xf32, #tpu.memory_space<vmem>>, vector<8x128xf32>,
    %c0_i32_8 = arith.constant 0 : i32
    %9 = arith.cmpi eq, %arg1, %c0_i32_8 : i32
    %10 = arith.extui %9 : i1 to i32
    %c0_i32_9 = arith.constant 0 : i32
    %11 = arith.cmpi ne, %10, %c0_i32_9 : i32
    scf.if %11 {
      %c0_10 = arith.constant 0 : index
      %c0_11 = arith.constant 0 : index
      %12 = vector.load %arg6[%c0_10, %c0_11] : memref<8x128xf32, #tpu.memory_space<vmem>>, vector<8x128xf32>
      %cst_12 = arith.constant 0.00176776689 : f32
      %13 = vector.broadcast %cst_12 : f32 to vector<8x128xf32>
      %14 = arith.mulf %12, %13 : vector<8x128xf32>
      %c0_13 = arith.constant 0 : index
      %c0_14 = arith.constant 0 : index
      %15 = vector.load %arg4[%c0_13, %c0_14] : memref<1x128xf32, #tpu.memory_space<vmem>>, vector<1x128xf32>
      %16 = vector.broadcast %15 : vector<1x128xf32> to vector<8x128xf32>
      %17 = arith.addf %14, %16 : vector<8x128xf32>
      %cst_15 = arith.constant 0.000000e+00 : f32
      %18 = vector.broadcast %cst_15 : f32 to vector<8x128xf32>
      %19 = arith.cmpf oge, %17, %18 : vector<8x128xf32>
      %cst_16 = arith.constant 1.41421354 : f32
      %cst_17 = arith.constant 0.282842726 : f32
      %20 = vector.broadcast %cst_16 : f32 to vector<8x128xf32>
      %21 = vector.broadcast %cst_17 : f32 to vector<8x128xf32>
      %22 = arith.select %19, %20, %21 : vector<8x128xi1>, vector<8x128xf32>
      %23 = arith.mulf %17, %22 : vector<8x128xf32>
      %c0_18 = arith.constant 0 : index
      %c0_19 = arith.constant 0 : index
      %24 = vector.load %arg5[%c0_18, %c0_19] : memref<8x128xf32, #tpu.memory_space<vmem>>, vector<8x128xf32>
      tpu.vector_store %arg5[%c0_18, %c0_19], %23 {strides = array<i32>} : memref<8x128xf32, #tpu.memory_space<vmem>>, vector<8x128xf32>,
    } else {
    }
    return
  }
  func.func @transform_0(%arg0: i32, %arg1: i32) -> (i32, i32) {
    %c0_i32 = arith.constant 0 : i32
    %c0_i32_0 = arith.constant 0 : i32
    return %c0_i32, %arg1 : i32, i32
  }
  func.func @transform_1(%arg0: i32, %arg1: i32) -> (i32, i32) {
    %c0_i32 = arith.constant 0 : i32
    return %arg1, %arg0 : i32, i32
  }
  func.func @transform_2(%arg0: i32, %arg1: i32) -> (i32, i32) {
    %c0_i32 = arith.constant 0 : i32
    %c0_i32_0 = arith.constant 0 : i32
    return %c0_i32, %arg0 : i32, i32
  }
  func.func @transform_3(%arg0: i32, %arg1: i32) -> (i32, i32) {
    %c0_i32 = arith.constant 0 : i32
    %c0_i32_0 = arith.constant 0 : i32
    return %c0_i32, %arg0 : i32, i32
  }
}

</mosaic_0001>

<llo_original>
// kernel: tpu_custom_call.1
$region0: #{tpu_custom_call.1}
  #allocation0 [shape = 'u32[]', space=smem, size = 0x4, offset = 0x4, fixed_abs, tag = 'smem constant byte address 0x4 - core index']
  #allocation1 [shape = 'u32[144,128]{1,0:T(1,128)}', space=vmem, size = 0x12000, scoped, tag = 'internal scratch']
  #allocation2 [shape = 'f32[8,128]{1,0:T(8,128)}', space=vmem, size = 0x1000, scoped, tag = 'scratch operand']
  %s0 = inlined_call_operand.hbm [shape: f32[8,128], index: 0, kind: input, shape index: {}]
  %s1 = inlined_call_operand.hbm [shape: f32[128,128], index: 1, kind: input, shape index: {}]
  %s2 = inlined_call_operand.vmem [shape: f32[1,128], index: 2, kind: input, shape index: {}]
  %s3 = inlined_call_operand.hbm [shape: f32[8,128], index: 3, kind: output, shape index: {}]
  %s4 = sld [smem:[#allocation0]]
  $region38: #{tpu_custom_call.1} parent=0
    _
  %s6 = ssub.s32 1, %s4
  %s7 = scalar_select 0, %s6, %s4
  $region1: #{tpu_custom_call.1} parent=0
    #allocation3 [shape = 'u8[4096]{0}', space=vmem, size = 0x1000, scoped, tag = 'input window, operand 0, single buffered']
    #allocation4 [shape = 's32[1]{0}', space=sflag, size = 0x4, scoped, tag = 'scoped memory for tpu_custom_call.1']
    #allocation5 [shape = 's32[1]{0}', space=sflag, size = 0x4, scoped, tag = 'scoped memory for tpu_custom_call.1']
    #allocation6 [shape = 'u8[65536]{0}', space=vmem, size = 0x10000, scoped, tag = 'input window, operand 1, single buffered']
    #allocation7 [shape = 's32[1]{0}', space=sflag, size = 0x4, scoped, tag = 'scoped memory for tpu_custom_call.1']
    #allocation8 [shape = 'u8[4096]{0}', space=vmem, size = 0x1000, scoped, tag = 'output window, operand 0, single buffered']
    %8 = vsyncpa [#allocation4], 0
    %9 = vsyncpa [#allocation7], 0
    %10 = vsyncpa [#allocation5], 0
    // Predicated region
    $region2: #{tpu_custom_call.1} parent=1 // pred_check
      _
    $region3: #{tpu_custom_call.1} parent=1 // pred_check_branch
      %12 = sbr.rel (0) target = $region5
    $region4: #{tpu_custom_call.1} parent=1 // pred_region
      %s14 = ssub.s32 128, 128
      %15 = vsyncadd [#allocation4], %s14
      %s17 = sshll.u32 [#allocation3], 4
      %s18 = int_to_ptr.vmem [resolvable:$true] %s17
      %20 = dma.hbm_to_vmem [thread:$0]  %s0, 128, %s18, [#allocation4]
    $region5: #{tpu_custom_call.1} parent=1 // pred_fallthru
      _
    // Predicated region
    $region6: #{tpu_custom_call.1} parent=1 // pred_check
      _
    $region7: #{tpu_custom_call.1} parent=1 // pred_check_branch
      %22 = sbr.rel (0) target = $region9
    $region8: #{tpu_custom_call.1} parent=1 // pred_region
      %s24 = ssub.s32 2048, 2048
      %25 = vsyncadd [#allocation7], %s24
      %s26 = sshll.u32 [#allocation6], 4
      %s27 = int_to_ptr.vmem [resolvable:$true] %s26
      %32 = dma.hbm_to_vmem [thread:$0]  %s1, 2048, %s27, [#allocation7], 128, 128, 8
    $region9: #{tpu_custom_call.1} parent=1 // pred_fallthru
      _
    // Predicated region
    $region10: #{tpu_custom_call.1} parent=1 // pred_check
      _
    $region11: #{tpu_custom_call.1} parent=1 // pred_check_branch
      %34 = sbr.rel (0) target = $region13
    $region12: #{tpu_custom_call.1} parent=1 // pred_region
      _
    $region13: #{tpu_custom_call.1} parent=1 // pred_fallthru
      _
    // Predicated region
    $region14: #{tpu_custom_call.1} parent=1 // pred_check
      _
    $region15: #{tpu_custom_call.1} parent=1 // pred_check_branch
      %36 = sbr.rel (0) target = $region17
    $region16: #{tpu_custom_call.1} parent=1 // pred_region
      %37 = dma.done [#allocation4], 128
    $region17: #{tpu_custom_call.1} parent=1 // pred_fallthru
      _
    // Predicated region
    $region18: #{tpu_custom_call.1} parent=1 // pred_check
      _
    $region19: #{tpu_custom_call.1} parent=1 // pred_check_branch
      %39 = sbr.rel (0) target = $region21
    $region20: #{tpu_custom_call.1} parent=1 // pred_region
      %40 = dma.done [#allocation7], 2048
    $region21: #{tpu_custom_call.1} parent=1 // pred_fallthru
      _
    %p41 = scmp.eq.s32.totalorder 0, 0
    // Predicated region
    $region22: #{tpu_custom_call.1} parent=1 // pred_check
      %p42 = pneg %p41
    $region23: #{tpu_custom_call.1} parent=1 // pred_check_branch
      %44 = sbr.rel (%p42) target = $region25
    $region24: #{tpu_custom_call.1} parent=1 // pred_region
      %45 = vst [vmem:[#allocation2] sm:$0xff] 0.0
    $region25: #{tpu_custom_call.1} parent=1 // pred_fallthru
      _
    %v46 = vld [vmem:[#allocation2] sm:$0xff]
    %v47 = vld [vmem:[#allocation3] sm:$0xff]
    %v48 = vld [vmem:[#allocation6] sm:$0xff]
    %v49 = vld [vmem:[#allocation6 + $0x8] sm:$0xff]
    %v50 = vld [vmem:[#allocation6 + $0x10] sm:$0xff]
    %v51 = vld [vmem:[#allocation6 + $0x18] sm:$0xff]
    %v52 = vld [vmem:[#allocation6 + $0x20] sm:$0xff]
    %v53 = vld [vmem:[#allocation6 + $0x28] sm:$0xff]
    %v54 = vld [vmem:[#allocation6 + $0x30] sm:$0xff]
    %v55 = vld [vmem:[#allocation6 + $0x38] sm:$0xff]
    %v56 = vld [vmem:[#allocation6 + $0x40] sm:$0xff]
    %v57 = vld [vmem:[#allocation6 + $0x48] sm:$0xff]
    %v58 = vld [vmem:[#allocation6 + $0x50] sm:$0xff]
    %v59 = vld [vmem:[#allocation6 + $0x58] sm:$0xff]
    %v60 = vld [vmem:[#allocation6 + $0x60] sm:$0xff]
    %v61 = vld [vmem:[#allocation6 + $0x68] sm:$0xff]
    %v62 = vld [vmem:[#allocation6 + $0x70] sm:$0xff]
    %v63 = vld [vmem:[#allocation6 + $0x78] sm:$0xff]
    %64 = vmatprep.subr.mxu0 0.0
    %65 = vmatpush1.msra.mxu0 %v48
    %66 = vmatprep.subr.mxu0 0.0
    %67 = vmatpush1.msra.mxu0 %v49
    %68 = vmatprep.subr.mxu0 0.0
    %69 = vmatpush1.msra.mxu0 %v50
    %70 = vmatprep.subr.mxu0 0.0
    %71 = vmatpush1.msra.mxu0 %v51
    %72 = vmatprep.subr.mxu0 0.0
    %73 = vmatpush1.msra.mxu0 %v52
    %74 = vmatprep.subr.mxu0 0.0
    %75 = vmatpush1.msra.mxu0 %v53
    %76 = vmatprep.subr.mxu0 0.0
    %77 = vmatpush1.msra.mxu0 %v54
    %78 = vmatprep.subr.mxu0 0.0
    %79 = vmatpush1.msra.mxu0 %v55
    %80 = vmatprep.subr.mxu0 0.0
    %81 = vmatpush1.msra.mxu0 %v56
    %82 = vmatprep.subr.mxu0 0.0
    %83 = vmatpush1.msra.mxu0 %v57
    %84 = vmatprep.subr.mxu0 0.0
    %85 = vmatpush1.msra.mxu0 %v58
    %86 = vmatprep.subr.mxu0 0.0
    %87 = vmatpush1.msra.mxu0 %v59
    %88 = vmatprep.subr.mxu0 0.0
    %89 = vmatpush1.msra.mxu0 %v60
    %90 = vmatprep.subr.mxu0 0.0
    %91 = vmatpush1.msra.mxu0 %v61
    %92 = vmatprep.subr.mxu0 0.0
    %93 = vmatpush1.msra.mxu0 %v62
    %94 = vmatprep.subr.mxu0 0.0
    %95 = vmatpush1.msra.mxu0 %v63
    %96 = vmatprep.subr.mxu0 0.0
    %97 = vmatpush1.msra.mxu0 0.0
    %98 = vmatprep.subr.mxu0 0.0
    %99 = vmatpush1.msra.mxu0 0.0
    %100 = vmatprep.subr.mxu0 0.0
    %101 = vmatpush1.msra.mxu0 0.0
    %102 = vmatprep.subr.mxu0 0.0
    %103 = vmatpush1.msra.mxu0 0.0
    %104 = vmatprep.subr.mxu0 0.0
    %105 = vmatpush1.msra.mxu0 0.0
    %106 = vmatprep.subr.mxu0 0.0
    %107 = vmatpush1.msra.mxu0 0.0
    %108 = vmatprep.subr.mxu0 0.0
    %109 = vmatpush1.msra.mxu0 0.0
    %110 = vmatprep.subr.mxu0 0.0
    %111 = vmatpush1.msra.mxu0 0.0
    %112 = vmatprep.subr.mxu0 0.0
    %113 = vmatpush1.msra.mxu0 0.0
    %114 = vmatprep.subr.mxu0 0.0
    %115 = vmatpush1.msra.mxu0 0.0
    %116 = vmatprep.subr.mxu0 0.0
    %117 = vmatpush1.msra.mxu0 0.0
    %118 = vmatprep.subr.mxu0 0.0
    %119 = vmatpush1.msra.mxu0 0.0
    %120 = vmatprep.subr.mxu0 0.0
    %121 = vmatpush1.msra.mxu0 0.0
    %122 = vmatprep.subr.mxu0 0.0
    %123 = vmatpush1.msra.mxu0 0.0
    %124 = vmatprep.subr.mxu0 0.0
    %125 = vmatpush1.msra.mxu0 0.0
    %126 = vmatprep.subr.mxu0 0.0
    %127 = vmatpush1.msra.mxu0 0.0
    %128 = vmatprep.mubr.f32.mxu0 0.0
    %129 = vmatmul.mubr.f32.gmra.mrb[0].mxu0 %v47
    %v130 = vpop.f32.mrb[0].mxu0
    %v131 = vadd.f32 0.0, %v130
    %v132 = vpop.f32.mrb[0].mxu0
    %133 = vdwg.mxu0
    %v134 = vadd.f32 %v46, %v131
    %135 = vst [vmem:[#allocation2] sm:$0xff] %v134
    // Predicated region
    $region26: #{tpu_custom_call.1} parent=1 // pred_check
      %p136 = pneg %p41
    $region27: #{tpu_custom_call.1} parent=1 // pred_check_branch
      %138 = sbr.rel (%p136) target = $region29
    $region28: #{tpu_custom_call.1} parent=1 // pred_region
      %v139 = vld [vmem:[#allocation2] sm:$0xff]
      %v140 = vmul.f32 %v139, 0.0017677669
      %v141 = vld [vmem:[%s2] sm:$0x1]
      %v143 = vlaneseq
      %v144 = vshrl.u32 %v143, 7
      %v145 = vsub.s32 0, %v144
      %v146 = vrot.slane %v141, %v145
      %v148 = vadd.f32 %v140, %v146
      %vm149 = vcmp.ge.f32.partialorder %v148, 0.0
      %v150 = vsel %vm149, 1.4142135, 0.28284273
      %v151 = vmul.f32 %v148, %v150
      %152 = vst [vmem:[#allocation8] sm:$0xff] %v151
    $region29: #{tpu_custom_call.1} parent=1 // pred_fallthru
      _
    // Predicated region
    $region30: #{tpu_custom_call.1} parent=1 // pred_check
      _
    $region31: #{tpu_custom_call.1} parent=1 // pred_check_branch
      %154 = sbr.rel (0) target = $region33
    $region32: #{tpu_custom_call.1} parent=1 // pred_region
      %s156 = ssub.s32 128, 128
      %157 = vsyncadd [#allocation5], %s156
      %s159 = sshll.u32 [#allocation8], 4
      %s160 = int_to_ptr.vmem [resolvable:$true] %s159
      %162 = dma.vmem_to_hbm [thread:$0]  %s160, 128, %s3, [#allocation5]
    $region33: #{tpu_custom_call.1} parent=1 // pred_fallthru
      _
    // Predicated region
    $region34: #{tpu_custom_call.1} parent=1 // pred_check
      _
    $region35: #{tpu_custom_call.1} parent=1 // pred_check_branch
      %164 = sbr.rel (0) target = $region37
    $region36: #{tpu_custom_call.1} parent=1 // pred_region
      %165 = dma.done [#allocation5], 128
    $region37: #{tpu_custom_call.1} parent=1 // pred_fallthru
      _
    %166 = vsyncpa [#allocation4], 1
    %167 = vsyncpa [#allocation7], 1
    %168 = vsyncpa [#allocation5], 1

</llo_original>
